<compile_context>
chip_gen: v6e
topology: v6e:2x2x1
jax: 0.10.0
libtpu: 0.0.40
codegen_flags: <defaults>
</compile_context>

<pallas_src>
import functools
import math

import jax
import jax.numpy as jnp
from jax.experimental import pallas as pl
from jax.experimental.pallas import tpu as pltpu


def _label_smoothing_kernel(tgt_ref, logits_ref, out_ref, *,
                            positive, negative, log_positive, log_negative,
                            num_classes, block_rows, total_rows):
    """One (block_rows, C) logits tile -> one scalar partial KL sum."""
    i = pl.program_id(0)

    x = logits_ref[...].astype(jnp.float32)          # (block_rows, C)
    tgt = tgt_ref[...]                                # (block_rows, 1) int32

    # Numerically stable log-softmax over the class (lane) axis.
    row_max = jnp.max(x, axis=1, keepdims=True)
    shifted = x - row_max
    lse = jnp.log(jnp.sum(jnp.exp(shifted), axis=1, keepdims=True))
    log_probs = shifted - lse

    # Smoothed one-hot target built from a class iota (no scatter needed).
    class_ids = jax.lax.broadcasted_iota(jnp.int32, (block_rows, num_classes), 1)
    is_target = class_ids == tgt
    soft = jnp.where(is_target, jnp.float32(positive), jnp.float32(negative))
    log_soft = jnp.where(is_target, jnp.float32(log_positive),
                         jnp.float32(log_negative))

    # kl_div(log_probs, soft, 'sum') pointwise terms; 0 where soft == 0
    # (matches torch.nn.functional.kl_div, incl. smooth_ratio == 0).
    contrib = jnp.where(soft > 0.0, soft * (log_soft - log_probs),
                        jnp.float32(0.0))

    # Mask rows past the true batch size (tail block of the cdiv grid).
    row_ids = i * block_rows + jax.lax.broadcasted_iota(
        jnp.int32, (block_rows, num_classes), 0)
    contrib = jnp.where(row_ids < total_rows, contrib, jnp.float32(0.0))

    # One scalar partial per block; final (tiny) reduce happens outside.
    out_ref[0, 0] = jnp.sum(contrib)


def _pick_block_rows(n_rows, n_classes, itemsize, tile_bytes=4 * 1024 * 1024):
    """Largest multiple-of-8 row tile keeping ~tile_bytes of logits per step."""
    if n_rows <= 8:
        return n_rows                                  # block == full array dim
    br = (tile_bytes // max(1, n_classes * itemsize)) // 8 * 8
    br = max(8, min(br, 8192))
    return min(br, (n_rows // 8) * 8)                  # first block fully in-bounds


def label_smoothing_loss(logits, target, *, smooth_ratio=0.1, block_rows=None):
    assert logits.ndim == 2, "logits must be (batch, num_classes)"
    batch, num_classes = logits.shape
    assert target.shape == (batch,), "target must be (batch,)"

    positive = 1.0 - smooth_ratio
    negative = smooth_ratio / (num_classes - 1)
    log_positive = math.log(positive) if positive > 0.0 else 0.0
    log_negative = math.log(negative) if negative > 0.0 else 0.0

    if block_rows is None:
        block_rows = _pick_block_rows(batch, num_classes,
                                      jnp.dtype(logits.dtype).itemsize)
    num_blocks = pl.cdiv(batch, block_rows)

    target_2d = target.astype(jnp.int32).reshape(batch, 1)

    kernel = functools.partial(
        _label_smoothing_kernel,
        positive=positive, negative=negative,
        log_positive=log_positive, log_negative=log_negative,
        num_classes=num_classes, block_rows=block_rows, total_rows=batch)

    partials = pl.pallas_call(
        kernel,
        out_shape=jax.ShapeDtypeStruct((num_blocks, 1), jnp.float32),
        grid_spec=pltpu.PrefetchScalarGridSpec(
            num_scalar_prefetch=0,
            grid=(num_blocks,),
            in_specs=[
                pl.BlockSpec((block_rows, 1), lambda i: (i, 0)),
                pl.BlockSpec((block_rows, num_classes), lambda i: (i, 0)),
            ],
            out_specs=pl.BlockSpec((1, 1), lambda i: (i, 0),
                                   memory_space=pltpu.SMEM),
        ),
        compiler_params=pltpu.CompilerParams(
            dimension_semantics=("parallel",)),
    )(target_2d, logits)

    return jnp.sum(partials) / jnp.float32(batch)


def _reference(logits, target, smooth_ratio):
    """Pure-JAX reference matching the PyTorch module."""
    num_classes = logits.shape[1]
    positive = 1.0 - smooth_ratio
    negative = smooth_ratio / (num_classes - 1)
    one_hot = jax.nn.one_hot(target, num_classes, dtype=jnp.float32)
    soft = one_hot * positive + (1.0 - one_hot) * negative
    logp = jax.nn.log_softmax(logits.astype(jnp.float32), axis=1)
    safe = jnp.where(soft > 0, soft, 1.0)
    kl = jnp.where(soft > 0, soft * (jnp.log(safe) - logp), 0.0)
    return jnp.sum(kl) / logits.shape[0]


if __name__ == "__main__":
    key = jax.random.PRNGKey(0)
    k1, k2, k3, k4 = jax.random.split(key, 4)
    smooth_ratio = 0.1

    # Primary small case implied by the module: (batch, num_classes) logits,
    # integer class targets.
    logits = jax.random.normal(k1, (8, 32), dtype=jnp.float32)
    target = jax.random.randint(k2, (8,), 0, 32, dtype=jnp.int32)
    loss = label_smoothing_loss(logits, target, smooth_ratio=smooth_ratio)
    jax.block_until_ready(loss)
    ref = _reference(logits, target, smooth_ratio)
    assert jnp.allclose(loss, ref, rtol=1e-5, atol=1e-5), (loss, ref)

    # Non-divisible batch to exercise the cdiv grid + in-kernel row mask.
    logits2 = jax.random.normal(k3, (50, 96), dtype=jnp.float32)
    target2 = jax.random.randint(k4, (50,), 0, 96, dtype=jnp.int32)
    loss2 = label_smoothing_loss(logits2, target2, smooth_ratio=smooth_ratio)
    jax.block_until_ready(loss2)
    ref2 = _reference(logits2, target2, smooth_ratio)
    assert jnp.allclose(loss2, ref2, rtol=1e-5, atol=1e-5), (loss2, ref2)

    print("KERNEL_OK")
</pallas_src>

<mosaic_0001>
module attributes {stable_mosaic.version = 11 : i64} {
  func.func @_label_smoothing_kernel(%arg0: i32, %arg1: memref<8x1xi32, #tpu.memory_space<vmem>>, %arg2: memref<8x32xf32, #tpu.memory_space<vmem>>, %arg3: memref<1x1xf32, #tpu.memory_space<smem>>) attributes {dimension_semantics = [#tpu.dimension_semantics<parallel>], iteration_bounds = array<i64: 1>, scalar_prefetch = 0 : i64, scratch_operands = 0 : i64, tpu.core_type = #tpu.core_type<tc>, window_params = [{transform_indices = @transform_0, window_bounds = array<i64: 8, 1>}, {transform_indices = @transform_1, window_bounds = array<i64: 8, 32>}, {transform_indices = @transform_2, window_bounds = array<i64: 1, 1>}]} {
    %c0 = arith.constant 0 : index
    %c0_0 = arith.constant 0 : index
    %0 = vector.load %arg2[%c0, %c0_0] : memref<8x32xf32, #tpu.memory_space<vmem>>, vector<8x32xf32>
    %c0_1 = arith.constant 0 : index
    %c0_2 = arith.constant 0 : index
    %1 = vector.load %arg1[%c0_1, %c0_2] : memref<8x1xi32, #tpu.memory_space<vmem>>, vector<8x1xi32>
    %cst = arith.constant dense<0xFF800000> : vector<8xf32>
    %2 = vector.multi_reduction <maximumf>, %0, %cst [1] : vector<8x32xf32> to vector<8xf32>
    %3 = vector.shape_cast %2 : vector<8xf32> to vector<8x1xf32>
    %4 = vector.broadcast %3 : vector<8x1xf32> to vector<8x32xf32>
    %5 = arith.subf %0, %4 : vector<8x32xf32>
    %6 = math.exp %5 : vector<8x32xf32>
    %cst_3 = arith.constant dense<0.000000e+00> : vector<8xf32>
    %7 = vector.multi_reduction <add>, %6, %cst_3 [1] : vector<8x32xf32> to vector<8xf32>
    %8 = vector.shape_cast %7 : vector<8xf32> to vector<8x1xf32>
    %9 = math.log %8 : vector<8x1xf32>
    %10 = vector.broadcast %9 : vector<8x1xf32> to vector<8x32xf32>
    %11 = arith.subf %5, %10 : vector<8x32xf32>
    %12 = tpu.iota {dimensions = array<i32: 1>} : vector<8x32xi32>
    %13 = vector.broadcast %1 : vector<8x1xi32> to vector<8x32xi32>
    %14 = arith.cmpi eq, %12, %13 : vector<8x32xi32>
    %cst_4 = arith.constant 0.899999976 : f32
    %cst_5 = arith.constant 0.0032258064 : f32
    %15 = vector.broadcast %cst_4 : f32 to vector<8x32xf32>
    %16 = vector.broadcast %cst_5 : f32 to vector<8x32xf32>
    %17 = arith.select %14, %15, %16 : vector<8x32xi1>, vector<8x32xf32>
    %cst_6 = arith.constant -0.105360515 : f32
    %cst_7 = arith.constant -5.73657227 : f32
    %18 = vector.broadcast %cst_6 : f32 to vector<8x32xf32>
    %19 = vector.broadcast %cst_7 : f32 to vector<8x32xf32>
    %20 = arith.select %14, %18, %19 : vector<8x32xi1>, vector<8x32xf32>
    %cst_8 = arith.constant 0.000000e+00 : f32
    %21 = vector.broadcast %cst_8 : f32 to vector<8x32xf32>
    %22 = arith.cmpf ogt, %17, %21 : vector<8x32xf32>
    %23 = arith.subf %20, %11 : vector<8x32xf32>
    %24 = arith.mulf %17, %23 : vector<8x32xf32>
    %cst_9 = arith.constant 0.000000e+00 : f32
    %25 = vector.broadcast %cst_9 : f32 to vector<8x32xf32>
    %26 = arith.select %22, %24, %25 : vector<8x32xi1>, vector<8x32xf32>
    %c8_i32 = arith.constant 8 : i32
    %27 = arith.muli %arg0, %c8_i32 : i32
    %28 = tpu.iota {dimensions = array<i32: 0>} : vector<8x32xi32>
    %29 = vector.broadcast %27 : i32 to vector<8x32xi32>
    %30 = arith.addi %29, %28 : vector<8x32xi32>
    %c8_i32_10 = arith.constant 8 : i32
    %31 = vector.broadcast %c8_i32_10 : i32 to vector<8x32xi32>
    %32 = arith.cmpi slt, %30, %31 : vector<8x32xi32>
    %cst_11 = arith.constant 0.000000e+00 : f32
    %33 = vector.broadcast %cst_11 : f32 to vector<8x32xf32>
    %34 = arith.select %32, %26, %33 : vector<8x32xi1>, vector<8x32xf32>
    %35 = vector.shape_cast %34 : vector<8x32xf32> to vector<1x8x32xf32>
    %cst_12 = arith.constant dense<0.000000e+00> : vector<1xf32>
    %36 = vector.multi_reduction <add>, %35, %cst_12 [1, 2] : vector<1x8x32xf32> to vector<1xf32>
    %37 = vector.shape_cast %36 : vector<1xf32> to vector<1x1x1xf32>
    %38 = vector.extract %37[0, 0, 0] : f32 from vector<1x1x1xf32>
    %c0_13 = arith.constant 0 : index
    %c0_14 = arith.constant 0 : index
    %39 = memref.load %arg3[%c0_13, %c0_14] : memref<1x1xf32, #tpu.memory_space<smem>>
    memref.store %38, %arg3[%c0_13, %c0_14] : memref<1x1xf32, #tpu.memory_space<smem>>
    return
  }
  func.func @transform_0(%arg0: i32) -> (i32, i32) {
    %c0_i32 = arith.constant 0 : i32
    %c0_i32_0 = arith.constant 0 : i32
    return %arg0, %c0_i32 : i32, i32
  }
  func.func @transform_1(%arg0: i32) -> (i32, i32) {
    %c0_i32 = arith.constant 0 : i32
    %c0_i32_0 = arith.constant 0 : i32
    return %arg0, %c0_i32 : i32, i32
  }
  func.func @transform_2(%arg0: i32) -> (i32, i32) {
    %c0_i32 = arith.constant 0 : i32
    %c0_i32_0 = arith.constant 0 : i32
    return %arg0, %c0_i32 : i32, i32
  }
}

</mosaic_0001>

<llo_original>
// kernel: tpu_custom_call.1
$region0: #{tpu_custom_call.1}
  #allocation0 [shape = 'u32[]', space=smem, size = 0x4, offset = 0x4, fixed_abs, tag = 'smem constant byte address 0x4 - core index']
  #allocation1 [shape = 'u32[144,128]{1,0:T(1,128)}', space=vmem, size = 0x12000, scoped, tag = 'internal scratch']
  %s0 = inlined_call_operand.vmem [shape: s32[8,1], index: 0, kind: input, shape index: {}]
  %s1 = inlined_call_operand.vmem [shape: f32[8,32], index: 1, kind: input, shape index: {}]
  %s2 = inlined_call_operand.hbm [shape: f32[1,1], index: 2, kind: output, shape index: {}]
  %s3 = sld [smem:[#allocation0]]
  $region18: #{tpu_custom_call.1} parent=0
    _
  %s5 = ssub.s32 1, %s3
  %s6 = scalar_select 0, %s5, %s3
  $region1: #{tpu_custom_call.1} parent=0
    #allocation2 [shape = 'u8[512]{0}', space=smem, size = 0x200, scoped, tag = 'output window, operand 0, single buffered']
    #allocation3 [shape = 's32[1]{0}', space=sflag, size = 0x4, scoped, tag = 'scoped memory for tpu_custom_call.1']
    %7 = vsyncpa [#allocation3], 0
    // Predicated region
    $region2: #{tpu_custom_call.1} parent=1 // pred_check
      _
    $region3: #{tpu_custom_call.1} parent=1 // pred_check_branch
      %9 = sbr.rel (0) target = $region5
    $region4: #{tpu_custom_call.1} parent=1 // pred_region
      _
    $region5: #{tpu_custom_call.1} parent=1 // pred_fallthru
      _
    // Predicated region
    $region6: #{tpu_custom_call.1} parent=1 // pred_check
      _
    $region7: #{tpu_custom_call.1} parent=1 // pred_check_branch
      %11 = sbr.rel (0) target = $region9
    $region8: #{tpu_custom_call.1} parent=1 // pred_region
      _
    $region9: #{tpu_custom_call.1} parent=1 // pred_fallthru
      _
    %v12 = vld [vmem:[%s1] sm:$0xff]
    %v13 = vld [vmem:[%s0] sm:$0xff]
    %vm14 = vcmask 261120
    %v15 = vsel %vm14, %v12, -inf
    %16 = vmax.xlane.f32.xlu0 %v15
    %v17 = vpop.xlane.xlu0 %16
    %v18 = vsub.f32 %v12, %v17
    %v19 = vmul.f32 %v18, 1.442695
    %v20 = vpow.pop %v19
    %v21 = vsel %vm14, %v20, 0.0
    %22 = vadd.xlane.f32.xlu0 %v21
    %v23 = vpop.xlane.xlu0 %22
    %v24 = vlog2.pop %v23
    %v25 = vmul.f32 %v24, 0.6931472
    %v26 = vsub.f32 %v18, %v25
    %v27 = vlaneseq
    %v28 = vand.u32 %v27, 127
    %29 = vset.pattern.permute.xlu0 0
    %30 = vperm.xlu0 %29, %v13
    %v31 = vpop.permute.xlu0 %30
    %vm32 = vcmp.eq.s32.totalorder %v28, %v31
    %v33 = vsel %vm32, 0.9, 0.0032258064
    %v34 = vsel %vm32, -0.105360515, -5.7365723
    %vm35 = vcmp.gt.f32.partialorder %v33, 0.0
    %v36 = vsub.f32 %v34, %v26
    %v37 = vmul.f32 %v33, %v36
    %v38 = vsel %vm35, %v37, 0.0
    %s39 = smul.u32 0, 8
    %v40 = vlaneseq
    %v41 = vshrl.u32 %v40, 7
    %v42 = vstv %s39
    %v43 = vadd.s32 %v42, %v41
    %vm44 = vcmp.lt.s32.totalorder %v43, 8
    %v45 = vsel %vm44, %v38, 0.0
    %v46 = vsel %vm14, %v45, 0.0
    %47 = vadd.xlane.f32.xlu0 %v46
    %v48 = vpop.xlane.xlu0 %47
    %v49 = vrot.slane %v48, 4
    %v50 = vadd.f32 %v48, %v49
    %v51 = vrot.slane %v50, 2
    %v52 = vadd.f32 %v50, %v51
    %v53 = vrot.slane %v52, 1
    %v54 = vadd.f32 %v52, %v53
    %s55 = vtos %v54
    %s56 = scalar_lea.smem [#allocation2], 0
    %57 = sst [smem:[%s56]] %s55
    // Predicated region
    $region10: #{tpu_custom_call.1} parent=1 // pred_check
      _
    $region11: #{tpu_custom_call.1} parent=1 // pred_check_branch
      %59 = sbr.rel (0) target = $region13
    $region12: #{tpu_custom_call.1} parent=1 // pred_region
      %s61 = ssub.s32 16, 16
      %62 = vsyncadd [#allocation3], %s61
      %65 = dma.smem_to_hbm [#allocation2], 16, %s2, [#allocation3]
    $region13: #{tpu_custom_call.1} parent=1 // pred_fallthru
      _
    // Predicated region
    $region14: #{tpu_custom_call.1} parent=1 // pred_check
      _
    $region15: #{tpu_custom_call.1} parent=1 // pred_check_branch
      %67 = sbr.rel (0) target = $region17
    $region16: #{tpu_custom_call.1} parent=1 // pred_region
      %68 = dma.done [#allocation3], 16
    $region17: #{tpu_custom_call.1} parent=1 // pred_fallthru
      _
    %69 = sfence
    %70 = vsyncpa [#allocation3], 1

</llo_original>
